<compile_context>
chip_gen: v7x
topology: tpu7x:2x2x1
jax: 0.10.0
libtpu: 0.0.40
codegen_flags: <defaults>
</compile_context>

<pallas_src>
from functools import partial

import numpy as np
import jax
import jax.numpy as jnp
from jax import lax
from jax.experimental import pallas as pl
from jax.experimental.pallas import tpu as pltpu


# ---------------------------------------------------------------------------
# Chunked streaming kernel.  grid = (batch [parallel], row-chunks [arbitrary]).
# Per batch, the (1, 5, 8, 128) output block stays resident across the chunk
# axis and holds lane-parallel accumulators:
#   [0] running min of d^2    [1] running max of d^2
#   [2] sum d^2               [3] sum d^4               [4] sum d^6
# The wrapper finishes the cross-lane reduce and
#   sum(cont1^2) = 100/(max-min)^2 * (S6 - 2*min*S4 + min^2*S2).
# ---------------------------------------------------------------------------
def _pohem_chunked_kernel(n_valid, tm, needs_mask, x_ref, t_ref, out_ref):
    c = pl.program_id(1)

    @pl.when(c == 0)
    def _init():
        out_ref[0, 0] = jnp.full((8, 128), jnp.inf, dtype=jnp.float32)
        out_ref[0, 1] = jnp.full((8, 128), -jnp.inf, dtype=jnp.float32)
        out_ref[0, 2] = jnp.zeros((8, 128), dtype=jnp.float32)
        out_ref[0, 3] = jnp.zeros((8, 128), dtype=jnp.float32)
        out_ref[0, 4] = jnp.zeros((8, 128), dtype=jnp.float32)

    x = x_ref[0].astype(jnp.float32)          # (tm, 128)
    t = t_ref[0].astype(jnp.float32)
    d = x - t

    if needs_mask:
        # Valid iff the element's flat index inside this batch slice < n_valid.
        # Covers both the zero-padded lane tail and the unspecified rows of the
        # (clipped) out-of-bounds tail chunk.
        row = lax.broadcasted_iota(jnp.int32, (tm, 128), 0)
        lane = lax.broadcasted_iota(jnp.int32, (tm, 128), 1)
        mask = (c * tm + row) * 128 + lane < n_valid
        d = jnp.where(mask, d, 0.0)           # pads contribute 0 to sums / max

    d2 = d * d
    d4 = d2 * d2
    d6 = d4 * d2
    d2_min = jnp.where(mask, d2, jnp.inf) if needs_mask else d2

    g = tm // 8                               # tm is a multiple of 8 by construction
    out_ref[0, 0] = jnp.minimum(out_ref[0, 0],
                                jnp.min(d2_min.reshape(g, 8, 128), axis=0))
    out_ref[0, 1] = jnp.maximum(out_ref[0, 1],
                                jnp.max(d2.reshape(g, 8, 128), axis=0))
    out_ref[0, 2] += jnp.sum(d2.reshape(g, 8, 128), axis=0)
    out_ref[0, 3] += jnp.sum(d4.reshape(g, 8, 128), axis=0)
    out_ref[0, 4] += jnp.sum(d6.reshape(g, 8, 128), axis=0)


# ---------------------------------------------------------------------------
# Small-problem fast path: one grid step, whole (B, M, 128) padded block in
# VMEM, direct (non-expanded) formula, scalar mean written directly.
# ---------------------------------------------------------------------------
def _pohem_small_kernel(n_valid, total_elems, needs_mask, x_ref, t_ref, out_ref):
    x = x_ref[...].astype(jnp.float32)        # (B, M, 128)
    t = t_ref[...].astype(jnp.float32)
    d = x - t
    if needs_mask:
        shp = d.shape
        row = lax.broadcasted_iota(jnp.int32, shp, 1)
        lane = lax.broadcasted_iota(jnp.int32, shp, 2)
        mask = row * shp[2] + lane < n_valid
        d = jnp.where(mask, d, 0.0)
    d2 = d * d
    d2_min = jnp.where(mask, d2, jnp.inf) if needs_mask else d2
    dmin = jnp.min(jnp.min(d2_min, axis=2, keepdims=True), axis=1, keepdims=True)
    dmax = jnp.max(jnp.max(d2, axis=2, keepdims=True), axis=1, keepdims=True)
    rng = dmax - dmin                         # (B, 1, 1)
    w = (d2 - dmin) * d                       # 0 at padded positions (d == 0)
    sw2 = jnp.sum(jnp.sum(w * w, axis=2, keepdims=True), axis=1, keepdims=True)
    per_batch = ((sw2 / rng) / rng) * jnp.float32(100.0)   # avoid (10/rng)^2 overflow
    out_ref[...] = jnp.full((1, 1), jnp.sum(per_batch) / jnp.float32(total_elems),
                            dtype=jnp.float32)


def _round_up(v, m):
    return ((v + m - 1) // m) * m


def p_ohem_mse(inputs, targets, *, max_rows_per_chunk=None,
               small_problem_bytes=2 << 20, _force_chunked=False):
    """P_OHEM forward with loss_fun = elementwise F.mse_loss.

    Accepts any shape with a leading batch dim (e.g. (B,C,H,W) or (B,C,L));
    normalisation is per-batch over all remaining dims, matching the module.
    Narrow dtypes (bf16/f16) stay narrow in HBM and are cast to f32 in-kernel.
    """
    assert inputs.shape == targets.shape
    assert inputs.ndim >= 2
    B = inputs.shape[0]
    N = int(np.prod(inputs.shape[1:]))
    total_elems = B * N
    itemsize = jnp.dtype(inputs.dtype).itemsize

    # Lane-dense layout: pad each flattened batch slice to a multiple of 128
    # lanes and view it as (M, 128).  Pads are zeros so d == 0 there.
    lanes = 128
    n_pad = _round_up(N, lanes)

    # Small-path threshold is in f32-equivalent bytes of ONE (padded) input so
    # the in-kernel f32 temps are accounted for regardless of input dtype.
    small = (not _force_chunked) and (B * n_pad * 4 <= small_problem_bytes)
    if not small and n_pad < 8 * lanes:
        # Guarantee at least 8 rows so chunk tiles are (8,128)-aligned.
        # TODO(synk): huge-B / tiny-N inputs inflate each slice to 1024 elems
        # here; a batch-along-lanes layout would avoid the extra HBM traffic.
        n_pad = 8 * lanes
    M = n_pad // lanes

    def to3d(a):
        a = a.reshape(B, N)
        if n_pad != N:
            a = jnp.pad(a, ((0, 0), (0, n_pad - N)))
        return a.reshape(B, M, lanes)

    x3 = to3d(inputs)
    t3 = to3d(targets)

    # ---- tiny problems: single grid step, no pipeline fill/drain ------------
    if small:
        needs_mask = n_pad != N
        out = pl.pallas_call(
            partial(_pohem_small_kernel, N, total_elems, needs_mask),
            out_shape=jax.ShapeDtypeStruct((1, 1), jnp.float32),
            grid=(1,),
            in_specs=[
                pl.BlockSpec((B, M, lanes), lambda i: (0, 0, 0)),
                pl.BlockSpec((B, M, lanes), lambda i: (0, 0, 0)),
            ],
            out_specs=pl.BlockSpec((1, 1), lambda i: (0, 0)),
            compiler_params=pltpu.CompilerParams(
                dimension_semantics=("arbitrary",),
                vmem_limit_bytes=32 << 20),   # safe on all gens (v7x default)
        )(x3, t3)
        return out[0, 0]

    # ---- streaming path: grid = (batch [parallel], chunks [arbitrary]) ------
    if max_rows_per_chunk is None:
        max_rows_per_chunk = 1024 if itemsize >= 4 else 2048
    tm = min(M, max_rows_per_chunk)
    tm = max(8, (tm // 8) * 8)                # (8,128)-aligned tiles
    num_chunks = (M + tm - 1) // tm           # cdiv: tail chunk masked in-kernel
    needs_mask = (n_pad != N) or (M % tm != 0)

    parts = pl.pallas_call(
        partial(_pohem_chunked_kernel, N, tm, needs_mask),
        out_shape=jax.ShapeDtypeStruct((B, 5, 8, 128), jnp.float32),
        grid=(B, num_chunks),
        in_specs=[
            pl.BlockSpec((1, tm, lanes), lambda b, c: (b, c, 0)),
            pl.BlockSpec((1, tm, lanes), lambda b, c: (b, c, 0)),
        ],
        out_specs=pl.BlockSpec((1, 5, 8, 128), lambda b, c: (b, 0, 0, 0)),
        compiler_params=pltpu.CompilerParams(
            dimension_semantics=("parallel", "arbitrary")),
    )(x3, t3)

    # Finish the tiny cross-lane reduce + scale formula in plain JAX.
    dmin = jnp.min(parts[:, 0], axis=(1, 2))
    dmax = jnp.max(parts[:, 1], axis=(1, 2))
    s2 = jnp.sum(parts[:, 2], axis=(1, 2))
    s4 = jnp.sum(parts[:, 3], axis=(1, 2))
    s6 = jnp.sum(parts[:, 4], axis=(1, 2))
    rng = dmax - dmin
    # sum(cont1^2) per batch = 100/rng^2 * (S6 - 2*dmin*S4 + dmin^2*S2)
    # TODO(synk): the one-pass d^6 expansion can overflow / cancel in f32 for
    # |inputs - targets| >~ 1e6; a two-pass variant would be needed there.
    ssum = s6 - 2.0 * dmin * s4 + (dmin * dmin) * s2
    per_batch = ((ssum / rng) / rng) * 100.0  # avoids (10/rng)^2 overflow
    return jnp.sum(per_batch) / jnp.float32(total_elems)


def p_ohem_mse_ref(inputs, targets):
    """Pure-JAX reference mirroring the PyTorch module."""
    x = inputs.astype(jnp.float32)
    t = targets.astype(jnp.float32)
    diff = (x - t) ** 2
    B = diff.shape[0]
    flat = diff.reshape(B, -1)
    dmin = flat.min(axis=1).reshape((B,) + (1,) * (diff.ndim - 1))
    dmax = flat.max(axis=1).reshape((B,) + (1,) * (diff.ndim - 1))
    dn = 10.0 * (diff - dmin) / (dmax - dmin)
    cont1 = dn * (x - t)
    return jnp.mean(cont1 ** 2)


if __name__ == "__main__":
    key = jax.random.PRNGKey(0)
    k1, k2, k3, k4, k5, k6 = jax.random.split(key, 6)

    # 1) Small case (B=2, C=4, H=W=16) -> one-shot path.
    x1 = jax.random.normal(k1, (2, 4, 16, 16), dtype=jnp.float32)
    t1 = jax.random.normal(k2, (2, 4, 16, 16), dtype=jnp.float32)
    o1 = p_ohem_mse(x1, t1)
    jax.block_until_ready(o1)
    r1 = p_ohem_mse_ref(x1, t1)
    assert jnp.allclose(o1, r1, rtol=1e-4, atol=1e-6), (o1, r1)

    # 2) Forced chunked path, evenly divisible rows (4 chunks per batch).
    x2 = jax.random.normal(k3, (2, 4, 64, 128), dtype=jnp.float32)
    t2 = jax.random.normal(k4, (2, 4, 64, 128), dtype=jnp.float32)
    o2 = p_ohem_mse(x2, t2, max_rows_per_chunk=64, _force_chunked=True)
    jax.block_until_ready(o2)
    r2 = p_ohem_mse_ref(x2, t2)
    assert jnp.allclose(o2, r2, rtol=1e-4, atol=1e-6), (o2, r2)

    # 3) Forced chunked path with N % 128 != 0 and a masked tail chunk.
    x3_ = jax.random.normal(k5, (2, 3, 20, 24), dtype=jnp.float32)
    t3_ = jax.random.normal(k6, (2, 3, 20, 24), dtype=jnp.float32)
    o3 = p_ohem_mse(x3_, t3_, _force_chunked=True)
    jax.block_until_ready(o3)
    r3 = p_ohem_mse_ref(x3_, t3_)
    assert jnp.allclose(o3, r3, rtol=1e-4, atol=1e-6), (o3, r3)

    print("KERNEL_OK")
</pallas_src>

<mosaic_0001>
module attributes {stable_mosaic.version = 11 : i64} {
  func.func @_pohem_small_kernel(%arg0: i32, %arg1: memref<2x8x128xf32, #tpu.memory_space<vmem>>, %arg2: memref<2x8x128xf32, #tpu.memory_space<vmem>>, %arg3: memref<1x1xf32, #tpu.memory_space<vmem>>) attributes {dimension_semantics = [#tpu.dimension_semantics<arbitrary>], iteration_bounds = array<i64: 1>, scalar_prefetch = 0 : i64, scratch_operands = 0 : i64, tpu.core_type = #tpu.core_type<tc>, window_params = [{pipeline_mode = #tpu.pipeline_mode<synchronous>, transform_indices = @transform_0, window_bounds = array<i64: 2, 8, 128>}, {pipeline_mode = #tpu.pipeline_mode<synchronous>, transform_indices = @transform_1, window_bounds = array<i64: 2, 8, 128>}, {pipeline_mode = #tpu.pipeline_mode<synchronous>, transform_indices = @transform_2, window_bounds = array<i64: 1, 1>}]} {
    %c0 = arith.constant 0 : index
    %c0_0 = arith.constant 0 : index
    %c0_1 = arith.constant 0 : index
    %0 = vector.load %arg1[%c0, %c0_0, %c0_1] : memref<2x8x128xf32, #tpu.memory_space<vmem>>, vector<2x8x128xf32>
    %c0_2 = arith.constant 0 : index
    %c0_3 = arith.constant 0 : index
    %c0_4 = arith.constant 0 : index
    %1 = vector.load %arg2[%c0_2, %c0_3, %c0_4] : memref<2x8x128xf32, #tpu.memory_space<vmem>>, vector<2x8x128xf32>
    %2 = arith.subf %0, %1 : vector<2x8x128xf32>
    %3 = arith.mulf %2, %2 : vector<2x8x128xf32>
    %cst = arith.constant dense<0x7F800000> : vector<2x8xf32>
    %4 = vector.multi_reduction <minimumf>, %3, %cst [2] : vector<2x8x128xf32> to vector<2x8xf32>
    %5 = vector.shape_cast %4 : vector<2x8xf32> to vector<2x8x1xf32>
    %cst_5 = arith.constant dense<0x7F800000> : vector<2x1xf32>
    %6 = vector.multi_reduction <minimumf>, %5, %cst_5 [1] : vector<2x8x1xf32> to vector<2x1xf32>
    %7 = vector.shape_cast %6 : vector<2x1xf32> to vector<2x1x1xf32>
    %cst_6 = arith.constant dense<0xFF800000> : vector<2x8xf32>
    %8 = vector.multi_reduction <maximumf>, %3, %cst_6 [2] : vector<2x8x128xf32> to vector<2x8xf32>
    %9 = vector.shape_cast %8 : vector<2x8xf32> to vector<2x8x1xf32>
    %cst_7 = arith.constant dense<0xFF800000> : vector<2x1xf32>
    %10 = vector.multi_reduction <maximumf>, %9, %cst_7 [1] : vector<2x8x1xf32> to vector<2x1xf32>
    %11 = vector.shape_cast %10 : vector<2x1xf32> to vector<2x1x1xf32>
    %12 = arith.subf %11, %7 : vector<2x1x1xf32>
    %13 = vector.broadcast %7 : vector<2x1x1xf32> to vector<2x8x128xf32>
    %14 = arith.subf %3, %13 : vector<2x8x128xf32>
    %15 = arith.mulf %14, %2 : vector<2x8x128xf32>
    %16 = arith.mulf %15, %15 : vector<2x8x128xf32>
    %cst_8 = arith.constant dense<0.000000e+00> : vector<2x8xf32>
    %17 = vector.multi_reduction <add>, %16, %cst_8 [2] : vector<2x8x128xf32> to vector<2x8xf32>
    %18 = vector.shape_cast %17 : vector<2x8xf32> to vector<2x8x1xf32>
    %cst_9 = arith.constant dense<0.000000e+00> : vector<2x1xf32>
    %19 = vector.multi_reduction <add>, %18, %cst_9 [1] : vector<2x8x1xf32> to vector<2x1xf32>
    %20 = vector.shape_cast %19 : vector<2x1xf32> to vector<2x1x1xf32>
    %21 = arith.divf %20, %12 : vector<2x1x1xf32>
    %22 = arith.divf %21, %12 : vector<2x1x1xf32>
    %cst_10 = arith.constant 1.000000e+02 : f32
    %23 = vector.broadcast %cst_10 : f32 to vector<2x1x1xf32>
    %24 = arith.mulf %22, %23 : vector<2x1x1xf32>
    %25 = vector.shape_cast %24 : vector<2x1x1xf32> to vector<1x2x1x1xf32>
    %cst_11 = arith.constant dense<0.000000e+00> : vector<1xf32>
    %26 = vector.multi_reduction <add>, %25, %cst_11 [1, 2, 3] : vector<1x2x1x1xf32> to vector<1xf32>
    %27 = vector.shape_cast %26 : vector<1xf32> to vector<1x1x1x1xf32>
    %28 = vector.extract %27[0, 0, 0, 0] : f32 from vector<1x1x1x1xf32>
    %cst_12 = arith.constant 2.048000e+03 : f32
    %29 = arith.divf %28, %cst_12 : f32
    %30 = vector.broadcast %29 : f32 to vector<1x1xf32>
    %c0_13 = arith.constant 0 : index
    %c0_14 = arith.constant 0 : index
    %31 = vector.load %arg3[%c0_13, %c0_14] : memref<1x1xf32, #tpu.memory_space<vmem>>, vector<1x1xf32>
    tpu.vector_store %arg3[%c0_13, %c0_14], %30 {strides = array<i32>} : memref<1x1xf32, #tpu.memory_space<vmem>>, vector<1x1xf32>,
    return
  }
  func.func @transform_0(%arg0: i32) -> (i32, i32, i32) {
    %c0_i32 = arith.constant 0 : i32
    %c0_i32_0 = arith.constant 0 : i32
    %c0_i32_1 = arith.constant 0 : i32
    %c0_i32_2 = arith.constant 0 : i32
    return %c0_i32, %c0_i32_0, %c0_i32_1 : i32, i32, i32
  }
  func.func @transform_1(%arg0: i32) -> (i32, i32, i32) {
    %c0_i32 = arith.constant 0 : i32
    %c0_i32_0 = arith.constant 0 : i32
    %c0_i32_1 = arith.constant 0 : i32
    %c0_i32_2 = arith.constant 0 : i32
    return %c0_i32, %c0_i32_0, %c0_i32_1 : i32, i32, i32
  }
  func.func @transform_2(%arg0: i32) -> (i32, i32) {
    %c0_i32 = arith.constant 0 : i32
    %c0_i32_0 = arith.constant 0 : i32
    %c0_i32_1 = arith.constant 0 : i32
    return %c0_i32, %c0_i32_0 : i32, i32
  }
}

</mosaic_0001>

<llo_original>
// kernel: tpu_custom_call.1
$region0: #{tpu_custom_call.1}
  #allocation0 [shape = 'u32[]', space=smem, size = 0x4, offset = 0x4, fixed_abs, tag = 'smem constant byte address 0x4 - core index']
  #allocation1 [shape = 'u32[144,128]{1,0:T(1,128)}', space=vmem, size = 0x12000, scoped, tag = 'internal scratch']
  %s0 = inlined_call_operand.hbm [shape: f32[2,8,128], index: 0, kind: input, shape index: {}]
  %s1 = inlined_call_operand.hbm [shape: f32[2,8,128], index: 1, kind: input, shape index: {}]
  %s2 = inlined_call_operand.hbm [shape: f32[1,1], index: 2, kind: output, shape index: {}]
  %s3 = sld [smem:[#allocation0]]
  $region26: #{tpu_custom_call.1} parent=0
    _
  %s5 = ssub.s32 1, %s3
  %s6 = scalar_select 0, %s5, %s3
  $region1: #{tpu_custom_call.1} parent=0
    #allocation2 [shape = 'u8[8192]{0}', space=vmem, size = 0x2000, scoped, tag = 'input window, operand 0, single buffered']
    #allocation3 [shape = 's32[1]{0}', space=sflag, size = 0x4, scoped, tag = 'scoped memory for tpu_custom_call.1']
    #allocation4 [shape = 's32[1]{0}', space=sflag, size = 0x4, scoped, tag = 'scoped memory for tpu_custom_call.1']
    #allocation5 [shape = 'u8[8192]{0}', space=vmem, size = 0x2000, scoped, tag = 'input window, operand 1, single buffered']
    #allocation6 [shape = 's32[1]{0}', space=sflag, size = 0x4, scoped, tag = 'scoped memory for tpu_custom_call.1']
    #allocation7 [shape = 'u8[512]{0}', space=vmem, size = 0x400, scoped, tag = 'output window, operand 0, single buffered']
    %7 = vsyncpa [#allocation3], 0
    %8 = vsyncpa [#allocation6], 0
    %9 = vsyncpa [#allocation4], 0
    // Predicated region
    $region2: #{tpu_custom_call.1} parent=1 // pred_check
      _
    $region3: #{tpu_custom_call.1} parent=1 // pred_check_branch
      %11 = sbr.rel (0) target = $region5
    $region4: #{tpu_custom_call.1} parent=1 // pred_region
      %s13 = ssub.s32 256, 256
      %14 = vsyncadd [#allocation3], %s13
      %s15 = sshll.u32 [#allocation2], 4
      %s16 = int_to_ptr.vmem [resolvable:$true] %s15
      %21 = dma.hbm_to_vmem [thread:$0]  %s0, 256, %s16, [#allocation3], 128, 128, 8
    $region5: #{tpu_custom_call.1} parent=1 // pred_fallthru
      _
    // Predicated region
    $region6: #{tpu_custom_call.1} parent=1 // pred_check
      _
    $region7: #{tpu_custom_call.1} parent=1 // pred_check_branch
      %23 = sbr.rel (0) target = $region9
    $region8: #{tpu_custom_call.1} parent=1 // pred_region
      %s25 = ssub.s32 256, 256
      %26 = vsyncadd [#allocation6], %s25
      %s27 = sshll.u32 [#allocation5], 4
      %s28 = int_to_ptr.vmem [resolvable:$true] %s27
      %33 = dma.hbm_to_vmem [thread:$0]  %s1, 256, %s28, [#allocation6], 128, 128, 8
    $region9: #{tpu_custom_call.1} parent=1 // pred_fallthru
      _
    // Predicated region
    $region10: #{tpu_custom_call.1} parent=1 // pred_check
      _
    $region11: #{tpu_custom_call.1} parent=1 // pred_check_branch
      %35 = sbr.rel (0) target = $region13
    $region12: #{tpu_custom_call.1} parent=1 // pred_region
      %36 = dma.done [#allocation3], 256
    $region13: #{tpu_custom_call.1} parent=1 // pred_fallthru
      _
    // Predicated region
    $region14: #{tpu_custom_call.1} parent=1 // pred_check
      _
    $region15: #{tpu_custom_call.1} parent=1 // pred_check_branch
      %38 = sbr.rel (0) target = $region17
    $region16: #{tpu_custom_call.1} parent=1 // pred_region
      %39 = dma.done [#allocation6], 256
    $region17: #{tpu_custom_call.1} parent=1 // pred_fallthru
      _
    %v40 = vld [vmem:[#allocation2] sm:$0xff]
    %v41 = vld [vmem:[#allocation2 + $0x8] sm:$0xff]
    %v42 = vld [vmem:[#allocation5] sm:$0xff]
    %v43 = vld [vmem:[#allocation5 + $0x8] sm:$0xff]
    %v44 = vsub.f32 %v40, %v42
    %v45 = vsub.f32 %v41, %v43
    %v46 = vmul.f32 %v44, %v44
    %v47 = vmul.f32 %v45, %v45
    %48 = vmin.xlane.f32.xlu0 %v46
    %v49 = vpop.xlane.xlu0 %48
    %50 = vmin.xlane.f32.xlu0 %v47
    %v51 = vpop.xlane.xlu0 %50
    %v52 = vrot.slane %v49, 4
    %v53 = vmin.f32 %v49, %v52
    %v54 = vrot.slane %v53, 2
    %v55 = vmin.f32 %v53, %v54
    %v56 = vrot.slane %v55, 1
    %v57 = vmin.f32 %v55, %v56
    %v58 = vrot.slane %v51, 4
    %v59 = vmin.f32 %v51, %v58
    %v60 = vrot.slane %v59, 2
    %v61 = vmin.f32 %v59, %v60
    %v62 = vrot.slane %v61, 1
    %v63 = vmin.f32 %v61, %v62
    %64 = vmax.xlane.f32.xlu0 %v46
    %v65 = vpop.xlane.xlu0 %64
    %66 = vmax.xlane.f32.xlu0 %v47
    %v67 = vpop.xlane.xlu0 %66
    %v68 = vrot.slane %v65, 4
    %v69 = vmax.f32 %v65, %v68
    %v70 = vrot.slane %v69, 2
    %v71 = vmax.f32 %v69, %v70
    %v72 = vrot.slane %v71, 1
    %v73 = vmax.f32 %v71, %v72
    %v74 = vrot.slane %v67, 4
    %v75 = vmax.f32 %v67, %v74
    %v76 = vrot.slane %v75, 2
    %v77 = vmax.f32 %v75, %v76
    %v78 = vrot.slane %v77, 1
    %v79 = vmax.f32 %v77, %v78
    %v80 = vsub.f32 %v73, %v57
    %v81 = vsub.f32 %v79, %v63
    %v82 = vsub.f32 %v46, %v57
    %v83 = vsub.f32 %v47, %v63
    %v84 = vmul.f32 %v82, %v44
    %v85 = vmul.f32 %v83, %v45
    %v86 = vmul.f32 %v84, %v84
    %v87 = vmul.f32 %v85, %v85
    %88 = vadd.xlane.f32.xlu0 %v86
    %v89 = vpop.xlane.xlu0 %88
    %90 = vadd.xlane.f32.xlu0 %v87
    %v91 = vpop.xlane.xlu0 %90
    %v92 = vrot.slane %v89, 4
    %v93 = vadd.f32 %v89, %v92
    %v94 = vrot.slane %v93, 2
    %v95 = vadd.f32 %v93, %v94
    %v96 = vrot.slane %v95, 1
    %v97 = vadd.f32 %v95, %v96
    %v98 = vrot.slane %v91, 4
    %v99 = vadd.f32 %v91, %v98
    %v100 = vrot.slane %v99, 2
    %v101 = vadd.f32 %v99, %v100
    %v102 = vrot.slane %v101, 1
    %v103 = vadd.f32 %v101, %v102
    %v104 = vrcp.pop %v80
    %v105 = vmul.f32 %v97, %v104
    %v106 = vrcp.pop %v81
    %v107 = vmul.f32 %v103, %v106
    %v108 = vmul.f32 %v105, %v104
    %v109 = vmul.f32 %v107, %v106
    %v110 = vmul.f32 %v108, 100.0
    %v111 = vmul.f32 %v109, 100.0
    %vm112 = vcmask 0
    %v113 = vsel %vm112, %v110, 0.0
    %v114 = vsel %vm112, %v111, 0.0
    %v115 = vadd.f32 %v113, %v114
    %116 = vadd.xlane.f32.xlu0 %v115
    %v117 = vpop.xlane.xlu0 %116
    %v118 = vrot.slane %v117, 4
    %v119 = vadd.f32 %v117, %v118
    %v120 = vrot.slane %v119, 2
    %v121 = vadd.f32 %v119, %v120
    %v122 = vrot.slane %v121, 1
    %v123 = vadd.f32 %v121, %v122
    %s124 = vtos %v123
    %v125 = vrcp.pop 2048.0
    %s126 = vtos %v125
    %s127 = smul.f32 %s124, %s126
    %v128 = vstv %s127
    %129 = vst.msk [vmem:[#allocation7] sm:$0x1] %vm112, %v128
    // Predicated region
    $region18: #{tpu_custom_call.1} parent=1 // pred_check
      _
    $region19: #{tpu_custom_call.1} parent=1 // pred_check_branch
      %131 = sbr.rel (0) target = $region21
    $region20: #{tpu_custom_call.1} parent=1 // pred_region
      %s133 = ssub.s32 16, 16
      %134 = vsyncadd [#allocation4], %s133
      %s136 = sshll.u32 [#allocation7], 4
      %s137 = int_to_ptr.vmem [resolvable:$true] %s136
      %139 = dma.vmem_to_hbm [thread:$0]  %s137, 16, %s2, [#allocation4]
    $region21: #{tpu_custom_call.1} parent=1 // pred_fallthru
      _
    // Predicated region
    $region22: #{tpu_custom_call.1} parent=1 // pred_check
      _
    $region23: #{tpu_custom_call.1} parent=1 // pred_check_branch
      %141 = sbr.rel (0) target = $region25
    $region24: #{tpu_custom_call.1} parent=1 // pred_region
      %142 = dma.done [#allocation4], 16
    $region25: #{tpu_custom_call.1} parent=1 // pred_fallthru
      _
    %143 = vsyncpa [#allocation3], 1
    %144 = vsyncpa [#allocation6], 1
    %145 = vsyncpa [#allocation4], 1

</llo_original>
